<compile_context>
chip_gen: v7x
topology: tpu7x:2x2x1
jax: 0.10.0
libtpu: 0.0.40
codegen_flags: <defaults>
</compile_context>

<pallas_src>
import functools

import jax
import jax.numpy as jnp
from jax.experimental import pallas as pl
from jax.experimental.pallas import tpu as pltpu

SMOOTH = 1.0
GAMMA = 0.75
ALPHA = 0.7

LANES = 128
SUBLANES = 8
MAX_TILE_ROWS = 2048          # (2048, 128) f32 block = 1 MiB per input


def _ftl_kernel(yp_ref, yt_ref, tp_ref, st_ref, sp_ref, *,
                tile_rows, tiles_per_split, rows, need_mask):
    i = pl.program_id(0)      # split index ("parallel")
    j = pl.program_id(1)      # tile within split ("arbitrary" reduction axis)

    @pl.when(j == 0)
    def _():
        tp_ref[...] = jnp.zeros_like(tp_ref)
        st_ref[...] = jnp.zeros_like(st_ref)
        sp_ref[...] = jnp.zeros_like(sp_ref)

    yp = yp_ref[...].astype(jnp.float32)
    yt = yt_ref[...].astype(jnp.float32)

    if need_mask:
        # Zero out rows beyond the valid range: covers both the ragged last
        # tile and the (clamped) duplicate tile of an uneven split.
        block_idx = i * tiles_per_split + j           # un-clamped block index
        row_start = block_idx * tile_rows
        row_ids = row_start + jax.lax.broadcasted_iota(
            jnp.int32, (tile_rows, LANES), 0)
        valid = row_ids < rows
        yp = jnp.where(valid, yp, 0.0)
        yt = jnp.where(valid, yt, 0.0)

    # (tile_rows, 128) -> (8, 128): adds over the leading axis, pure VPU work.
    def red(x):
        return jnp.sum(x.reshape(tile_rows // SUBLANES, SUBLANES, LANES), axis=0)

    tp_ref[...] += red(yt * yp)     # partial sum(y_true * y_pred)
    st_ref[...] += red(yt)          # partial sum(y_true)
    sp_ref[...] += red(yp)          # partial sum(y_pred)


@jax.jit
def focal_tversky_loss(y_pred, y_true):
    """Pallas implementation of FocalTverskyLoss.forward (smooth=1, gamma=0.75, alpha=0.7)."""
    yp = jnp.ravel(y_pred)
    yt = jnp.ravel(y_true)
    n = yp.shape[0]

    # Pad only up to one (8, 128) vreg multiple so the flat array can be viewed
    # as (rows, 128) with rows % 8 == 0.  For typical NN shapes this is a free
    # reshape (no copy).
    vreg = SUBLANES * LANES
    padded = ((n + vreg - 1) // vreg) * vreg
    if padded != n:
        # TODO(synk): this copies both inputs when n % 1024 != 0; an in-kernel
        # lane mask would avoid even that, but the case is rare in practice.
        yp = jnp.pad(yp, (0, padded - n))
        yt = jnp.pad(yt, (0, padded - n))

    rows = padded // LANES
    yp2 = yp.reshape(rows, LANES)
    yt2 = yt.reshape(rows, LANES)

    tile_rows = min(MAX_TILE_ROWS, rows)            # multiple of 8 by construction
    num_tiles = -(-rows // tile_rows)
    splits = 2 if num_tiles >= 2 else 1             # megacore split (v7x)
    tiles_per_split = -(-num_tiles // splits)
    need_mask = (splits * tiles_per_split * tile_rows) != rows

    def in_map(i, j):
        # Clamp so the (possibly duplicated) last block stays in bounds; its
        # contribution is zeroed by the in-kernel row mask.
        return (jnp.minimum(i * tiles_per_split + j, num_tiles - 1), 0)

    kernel = functools.partial(
        _ftl_kernel,
        tile_rows=tile_rows,
        tiles_per_split=tiles_per_split,
        rows=rows,
        need_mask=need_mask,
    )

    part_shape = jax.ShapeDtypeStruct((splits, SUBLANES, LANES), jnp.float32)
    out_spec = pl.BlockSpec((None, SUBLANES, LANES), lambda i, j: (i, 0, 0))

    tp_parts, st_parts, sp_parts = pl.pallas_call(
        kernel,
        out_shape=(part_shape, part_shape, part_shape),
        grid_spec=pltpu.PrefetchScalarGridSpec(
            num_scalar_prefetch=0,
            grid=(splits, tiles_per_split),
            in_specs=[
                pl.BlockSpec((tile_rows, LANES), in_map),
                pl.BlockSpec((tile_rows, LANES), in_map),
            ],
            out_specs=[out_spec, out_spec, out_spec],
        ),
        compiler_params=pltpu.CompilerParams(
            dimension_semantics=("parallel", "arbitrary"),
        ),
    )(yp2, yt2)

    tp = jnp.sum(tp_parts)            # true positives
    s_t = jnp.sum(st_parts)           # sum(y_true)
    s_p = jnp.sum(sp_parts)           # sum(y_pred)
    fn = s_t - tp                     # false negatives
    fp = s_p - tp                     # false positives

    pt_1 = (tp + SMOOTH) / (tp + ALPHA * fn + (1.0 - ALPHA) * fp + SMOOTH)
    return jnp.power(1.0 - pt_1, GAMMA)


def _reference(y_pred, y_true):
    yp = jnp.ravel(y_pred).astype(jnp.float32)
    yt = jnp.ravel(y_true).astype(jnp.float32)
    tp = jnp.sum(yt * yp)
    fn = jnp.sum(yt * (1.0 - yp))
    fp = jnp.sum((1.0 - yt) * yp)
    pt_1 = (tp + SMOOTH) / (tp + ALPHA * fn + (1.0 - ALPHA) * fp + SMOOTH)
    return jnp.power(1.0 - pt_1, GAMMA)


if __name__ == "__main__":
    key = jax.random.PRNGKey(0)
    k1, k2 = jax.random.split(key)
    # NCHW, as a segmentation-style prediction / target pair.
    y_pred = jax.nn.sigmoid(jax.random.normal(k1, (2, 4, 16, 16), dtype=jnp.float32))
    y_true = (jax.random.uniform(k2, (2, 4, 16, 16)) > 0.5).astype(jnp.float32)

    loss = focal_tversky_loss(y_pred, y_true)
    jax.block_until_ready(loss)

    ref = _reference(y_pred, y_true)
    assert jnp.allclose(loss, ref, rtol=1e-5, atol=1e-6), (loss, ref)
    print("KERNEL_OK")
</pallas_src>

<mosaic_0001>
module attributes {stable_mosaic.version = 11 : i64} {
  func.func @_ftl_kernel(%arg0: i32, %arg1: i32, %arg2: memref<16x128xf32, #tpu.memory_space<vmem>>, %arg3: memref<16x128xf32, #tpu.memory_space<vmem>>, %arg4: memref<1x8x128xf32, #tpu.memory_space<vmem>>, %arg5: memref<1x8x128xf32, #tpu.memory_space<vmem>>, %arg6: memref<1x8x128xf32, #tpu.memory_space<vmem>>) attributes {dimension_semantics = [#tpu.dimension_semantics<parallel>, #tpu.dimension_semantics<arbitrary>], iteration_bounds = array<i64: 1, 1>, scalar_prefetch = 0 : i64, scratch_operands = 0 : i64, tpu.core_type = #tpu.core_type<tc>, window_params = [{transform_indices = @transform_0, window_bounds = array<i64: 16, 128>}, {transform_indices = @transform_1, window_bounds = array<i64: 16, 128>}, {transform_indices = @transform_2, window_bounds = array<i64: 1, 8, 128>}, {transform_indices = @transform_3, window_bounds = array<i64: 1, 8, 128>}, {transform_indices = @transform_4, window_bounds = array<i64: 1, 8, 128>}]} {
    %c0_i32 = arith.constant 0 : i32
    %0 = arith.cmpi eq, %arg1, %c0_i32 : i32
    %1 = arith.extui %0 : i1 to i32
    %c0_i32_0 = arith.constant 0 : i32
    %2 = arith.cmpi ne, %1, %c0_i32_0 : i32
    scf.if %2 {
      %cst_24 = arith.constant 0.000000e+00 : f32
      %30 = vector.broadcast %cst_24 : f32 to vector<8x128xf32>
      %c0_25 = arith.constant 0 : index
      %c0_26 = arith.constant 0 : index
      %c0_27 = arith.constant 0 : index
      %31 = vector.load %arg4[%c0_25, %c0_26, %c0_27] : memref<1x8x128xf32, #tpu.memory_space<vmem>>, vector<1x8x128xf32>
      %32 = vector.shape_cast %31 : vector<1x8x128xf32> to vector<8x128xf32>
      %33 = vector.shape_cast %30 : vector<8x128xf32> to vector<1x8x128xf32>
      tpu.vector_store %arg4[%c0_25, %c0_26, %c0_27], %33 {strides = array<i32>} : memref<1x8x128xf32, #tpu.memory_space<vmem>>, vector<1x8x128xf32>,
      %cst_28 = arith.constant 0.000000e+00 : f32
      %34 = vector.broadcast %cst_28 : f32 to vector<8x128xf32>
      %c0_29 = arith.constant 0 : index
      %c0_30 = arith.constant 0 : index
      %c0_31 = arith.constant 0 : index
      %35 = vector.load %arg5[%c0_29, %c0_30, %c0_31] : memref<1x8x128xf32, #tpu.memory_space<vmem>>, vector<1x8x128xf32>
      %36 = vector.shape_cast %35 : vector<1x8x128xf32> to vector<8x128xf32>
      %37 = vector.shape_cast %34 : vector<8x128xf32> to vector<1x8x128xf32>
      tpu.vector_store %arg5[%c0_29, %c0_30, %c0_31], %37 {strides = array<i32>} : memref<1x8x128xf32, #tpu.memory_space<vmem>>, vector<1x8x128xf32>,
      %cst_32 = arith.constant 0.000000e+00 : f32
      %38 = vector.broadcast %cst_32 : f32 to vector<8x128xf32>
      %c0_33 = arith.constant 0 : index
      %c0_34 = arith.constant 0 : index
      %c0_35 = arith.constant 0 : index
      %39 = vector.load %arg6[%c0_33, %c0_34, %c0_35] : memref<1x8x128xf32, #tpu.memory_space<vmem>>, vector<1x8x128xf32>
      %40 = vector.shape_cast %39 : vector<1x8x128xf32> to vector<8x128xf32>
      %41 = vector.shape_cast %38 : vector<8x128xf32> to vector<1x8x128xf32>
      tpu.vector_store %arg6[%c0_33, %c0_34, %c0_35], %41 {strides = array<i32>} : memref<1x8x128xf32, #tpu.memory_space<vmem>>, vector<1x8x128xf32>,
    } else {
    }
    %c0 = arith.constant 0 : index
    %c0_1 = arith.constant 0 : index
    %3 = vector.load %arg2[%c0, %c0_1] : memref<16x128xf32, #tpu.memory_space<vmem>>, vector<16x128xf32>
    %c0_2 = arith.constant 0 : index
    %c0_3 = arith.constant 0 : index
    %4 = vector.load %arg3[%c0_2, %c0_3] : memref<16x128xf32, #tpu.memory_space<vmem>>, vector<16x128xf32>
    %c0_4 = arith.constant 0 : index
    %c0_5 = arith.constant 0 : index
    %c0_6 = arith.constant 0 : index
    %5 = vector.load %arg4[%c0_4, %c0_5, %c0_6] : memref<1x8x128xf32, #tpu.memory_space<vmem>>, vector<1x8x128xf32>
    %6 = vector.shape_cast %5 : vector<1x8x128xf32> to vector<8x128xf32>
    %7 = arith.mulf %4, %3 : vector<16x128xf32>
    %8 = vector.shape_cast %7 : vector<16x128xf32> to vector<2x8x128xf32>
    %cst = arith.constant dense<0.000000e+00> : vector<8x128xf32>
    %9 = vector.multi_reduction <add>, %8, %cst [0] : vector<2x8x128xf32> to vector<8x128xf32>
    %10 = arith.addf %6, %9 : vector<8x128xf32>
    %c0_7 = arith.constant 0 : index
    %c0_8 = arith.constant 0 : index
    %c0_9 = arith.constant 0 : index
    %11 = vector.load %arg4[%c0_7, %c0_8, %c0_9] : memref<1x8x128xf32, #tpu.memory_space<vmem>>, vector<1x8x128xf32>
    %12 = vector.shape_cast %11 : vector<1x8x128xf32> to vector<8x128xf32>
    %13 = vector.shape_cast %10 : vector<8x128xf32> to vector<1x8x128xf32>
    tpu.vector_store %arg4[%c0_7, %c0_8, %c0_9], %13 {strides = array<i32>} : memref<1x8x128xf32, #tpu.memory_space<vmem>>, vector<1x8x128xf32>,
    %c0_10 = arith.constant 0 : index
    %c0_11 = arith.constant 0 : index
    %c0_12 = arith.constant 0 : index
    %14 = vector.load %arg5[%c0_10, %c0_11, %c0_12] : memref<1x8x128xf32, #tpu.memory_space<vmem>>, vector<1x8x128xf32>
    %15 = vector.shape_cast %14 : vector<1x8x128xf32> to vector<8x128xf32>
    %16 = vector.shape_cast %4 : vector<16x128xf32> to vector<2x8x128xf32>
    %cst_13 = arith.constant dense<0.000000e+00> : vector<8x128xf32>
    %17 = vector.multi_reduction <add>, %16, %cst_13 [0] : vector<2x8x128xf32> to vector<8x128xf32>
    %18 = arith.addf %15, %17 : vector<8x128xf32>
    %c0_14 = arith.constant 0 : index
    %c0_15 = arith.constant 0 : index
    %c0_16 = arith.constant 0 : index
    %19 = vector.load %arg5[%c0_14, %c0_15, %c0_16] : memref<1x8x128xf32, #tpu.memory_space<vmem>>, vector<1x8x128xf32>
    %20 = vector.shape_cast %19 : vector<1x8x128xf32> to vector<8x128xf32>
    %21 = vector.shape_cast %18 : vector<8x128xf32> to vector<1x8x128xf32>
    tpu.vector_store %arg5[%c0_14, %c0_15, %c0_16], %21 {strides = array<i32>} : memref<1x8x128xf32, #tpu.memory_space<vmem>>, vector<1x8x128xf32>,
    %c0_17 = arith.constant 0 : index
    %c0_18 = arith.constant 0 : index
    %c0_19 = arith.constant 0 : index
    %22 = vector.load %arg6[%c0_17, %c0_18, %c0_19] : memref<1x8x128xf32, #tpu.memory_space<vmem>>, vector<1x8x128xf32>
    %23 = vector.shape_cast %22 : vector<1x8x128xf32> to vector<8x128xf32>
    %24 = vector.shape_cast %3 : vector<16x128xf32> to vector<2x8x128xf32>
    %cst_20 = arith.constant dense<0.000000e+00> : vector<8x128xf32>
    %25 = vector.multi_reduction <add>, %24, %cst_20 [0] : vector<2x8x128xf32> to vector<8x128xf32>
    %26 = arith.addf %23, %25 : vector<8x128xf32>
    %c0_21 = arith.constant 0 : index
    %c0_22 = arith.constant 0 : index
    %c0_23 = arith.constant 0 : index
    %27 = vector.load %arg6[%c0_21, %c0_22, %c0_23] : memref<1x8x128xf32, #tpu.memory_space<vmem>>, vector<1x8x128xf32>
    %28 = vector.shape_cast %27 : vector<1x8x128xf32> to vector<8x128xf32>
    %29 = vector.shape_cast %26 : vector<8x128xf32> to vector<1x8x128xf32>
    tpu.vector_store %arg6[%c0_21, %c0_22, %c0_23], %29 {strides = array<i32>} : memref<1x8x128xf32, #tpu.memory_space<vmem>>, vector<1x8x128xf32>,
    return
  }
  func.func @transform_0(%arg0: i32, %arg1: i32) -> (i32, i32) {
    %c1_i32 = arith.constant 1 : i32
    %0 = arith.muli %arg0, %c1_i32 : i32
    %1 = arith.addi %0, %arg1 : i32
    %c0_i32 = arith.constant 0 : i32
    %2 = arith.minsi %1, %c0_i32 : i32
    %c0_i32_0 = arith.constant 0 : i32
    %c0_i32_1 = arith.constant 0 : i32
    return %2, %c0_i32_0 : i32, i32
  }
  func.func @transform_1(%arg0: i32, %arg1: i32) -> (i32, i32) {
    %c1_i32 = arith.constant 1 : i32
    %0 = arith.muli %arg0, %c1_i32 : i32
    %1 = arith.addi %0, %arg1 : i32
    %c0_i32 = arith.constant 0 : i32
    %2 = arith.minsi %1, %c0_i32 : i32
    %c0_i32_0 = arith.constant 0 : i32
    %c0_i32_1 = arith.constant 0 : i32
    return %2, %c0_i32_0 : i32, i32
  }
  func.func @transform_2(%arg0: i32, %arg1: i32) -> (i32, i32, i32) {
    %c0_i32 = arith.constant 0 : i32
    %c0_i32_0 = arith.constant 0 : i32
    %c0_i32_1 = arith.constant 0 : i32
    return %arg0, %c0_i32, %c0_i32_0 : i32, i32, i32
  }
  func.func @transform_3(%arg0: i32, %arg1: i32) -> (i32, i32, i32) {
    %c0_i32 = arith.constant 0 : i32
    %c0_i32_0 = arith.constant 0 : i32
    %c0_i32_1 = arith.constant 0 : i32
    return %arg0, %c0_i32, %c0_i32_0 : i32, i32, i32
  }
  func.func @transform_4(%arg0: i32, %arg1: i32) -> (i32, i32, i32) {
    %c0_i32 = arith.constant 0 : i32
    %c0_i32_0 = arith.constant 0 : i32
    %c0_i32_1 = arith.constant 0 : i32
    return %arg0, %c0_i32, %c0_i32_0 : i32, i32, i32
  }
}

</mosaic_0001>

<llo_original>
// kernel: focal_tversky_loss.1
$region0: #{focal_tversky_loss.1}
  #allocation0 [shape = 'u32[]', space=smem, size = 0x4, offset = 0x4, fixed_abs, tag = 'smem constant byte address 0x4 - core index']
  #allocation1 [shape = 'u32[144,128]{1,0:T(1,128)}', space=vmem, size = 0x12000, scoped, tag = 'internal scratch']
  %s0 = inlined_call_operand.vmem [shape: f32[16,128], index: 0, kind: input, shape index: {}]
  %s1 = inlined_call_operand.vmem [shape: f32[16,128], index: 1, kind: input, shape index: {}]
  %s2 = inlined_call_operand.vmem [shape: f32[1,8,128], index: 2, kind: output, shape index: {0}]
  %s3 = inlined_call_operand.vmem [shape: f32[1,8,128], index: 3, kind: output, shape index: {1}]
  %s4 = inlined_call_operand.vmem [shape: f32[1,8,128], index: 4, kind: output, shape index: {2}]
  %5 = xla_tuple %s2, %s3, %s4
  %s6 = sld [smem:[#allocation0]]
  $region38: #{focal_tversky_loss.1} parent=0
    _
  %s8 = ssub.s32 1, %s6
  %s9 = scalar_select 0, %s8, %s6
  // Predicated region
  $region2: #{focal_tversky_loss.1} parent=0 // pred_check
    _
  $region3: #{focal_tversky_loss.1} parent=0 // pred_check_branch
    %11 = sbr.rel (0) target = $region5
  $region4: #{focal_tversky_loss.1} parent=0 // pred_region
    %s12 = sadd.s32 0, 0
    %p13 = scmp.lt.s32.totalorder %s12, 0
    %s14 = scalar_select %p13, %s12, 0
    %s15 = smul.u32 2, %s14
    %p16 = scmp.lt.s32.totalorder %s15, 1
    %s17 = scalar_select %p16, %s15, 1
    %s18 = smul.addr %s17, 8
    %s19 = scalar_lea.vmem %s0, %s18
    %s20 = sadd.s32 0, 0
    %p21 = scmp.lt.s32.totalorder %s20, 0
    %s22 = scalar_select %p21, %s20, 0
    %s23 = smul.u32 2, %s22
  $region5: #{focal_tversky_loss.1} parent=0 // pred_fallthru
    _
  // Predicated region
  $region6: #{focal_tversky_loss.1} parent=0 // pred_check
    _
  $region7: #{focal_tversky_loss.1} parent=0 // pred_check_branch
    %25 = sbr.rel (0) target = $region9
  $region8: #{focal_tversky_loss.1} parent=0 // pred_region
    %s26 = sadd.s32 0, 0
    %p27 = scmp.lt.s32.totalorder %s26, 0
    %s28 = scalar_select %p27, %s26, 0
    %s29 = smul.u32 2, %s28
    %p30 = scmp.lt.s32.totalorder %s29, 1
    %s31 = scalar_select %p30, %s29, 1
    %s32 = smul.addr %s31, 8
    %s33 = scalar_lea.vmem %s1, %s32
    %s34 = sadd.s32 0, 0
    %p35 = scmp.lt.s32.totalorder %s34, 0
    %s36 = scalar_select %p35, %s34, 0
    %s37 = smul.u32 2, %s36
  $region9: #{focal_tversky_loss.1} parent=0 // pred_fallthru
    _
  %s38 = sadd.s32 0, 0
  %p39 = scmp.lt.s32.totalorder %s38, 0
  %s40 = scalar_select %p39, %s38, 0
  %s41 = smul.u32 2, %s40
  %p42 = scmp.lt.s32.totalorder %s41, 1
  %s43 = scalar_select %p42, %s41, 1
  %s44 = smul.addr %s43, 8
  %s45 = scalar_lea.vmem %s0, %s44
  %s46 = sadd.s32 0, 0
  %p47 = scmp.lt.s32.totalorder %s46, 0
  %s48 = scalar_select %p47, %s46, 0
  %s49 = smul.u32 2, %s48
  %p50 = scmp.lt.s32.totalorder %s49, 1
  %s51 = scalar_select %p50, %s49, 1
  %s52 = smul.addr %s51, 8
  %s53 = scalar_lea.vmem %s1, %s52
  %s54 = sadd.s32 0, 0
  %p55 = scmp.lt.s32.totalorder %s54, 0
  %s56 = scalar_select %p55, %s54, 0
  %s57 = smul.u32 2, %s56
  %p58 = scmp.lt.s32.totalorder %s57, 1
  %s59 = scalar_select %p58, %s57, 1
  %s60 = smul.addr %s59, 8
  %s61 = scalar_lea.vmem %s0, %s60
  %s62 = sadd.s32 0, 0
  %p63 = scmp.lt.s32.totalorder %s62, 0
  %s64 = scalar_select %p63, %s62, 0
  %s65 = smul.u32 2, %s64
  %s66 = sadd.s32 0, 0
  %p67 = scmp.lt.s32.totalorder %s66, 0
  %s68 = scalar_select %p67, %s66, 0
  %s69 = smul.u32 2, %s68
  %p70 = scmp.lt.s32.totalorder %s69, 1
  %s71 = scalar_select %p70, %s69, 1
  %s72 = smul.addr %s71, 8
  %s73 = scalar_lea.vmem %s1, %s72
  %s74 = sadd.s32 0, 0
  %p75 = scmp.lt.s32.totalorder %s74, 0
  %s76 = scalar_select %p75, %s74, 0
  %s77 = smul.u32 2, %s76
  %p78 = scmp.eq.s32.totalorder 0, 0
  // Predicated region
  $region10: #{focal_tversky_loss.1} parent=0 // pred_check
    %p79 = pneg %p78
  $region11: #{focal_tversky_loss.1} parent=0 // pred_check_branch
    %81 = sbr.rel (%p79) target = $region13
  $region12: #{focal_tversky_loss.1} parent=0 // pred_region
    %82 = vst [vmem:[%s2] sm:$0xff] 0.0
    %83 = vst [vmem:[%s3] sm:$0xff] 0.0
    %84 = vst [vmem:[%s4] sm:$0xff] 0.0
  $region13: #{focal_tversky_loss.1} parent=0 // pred_fallthru
    _
  %v85 = vld [vmem:[%s61] sm:$0xff]
  %v86 = vld [vmem:[%s61 + $0x8] sm:$0xff]
  %v87 = vld [vmem:[%s73] sm:$0xff]
  %v88 = vld [vmem:[%s73 + $0x8] sm:$0xff]
  %v89 = vld [vmem:[%s2] sm:$0xff]
  %v90 = vmul.f32 %v87, %v85
  %v91 = vmul.f32 %v88, %v86
  %v92 = vadd.f32 %v90, %v91
  %v93 = vadd.f32 %v89, %v92
  %94 = vst [vmem:[%s2] sm:$0xff] %v93
  %v95 = vld [vmem:[%s3] sm:$0xff]
  %v96 = vadd.f32 %v87, %v88
  %v97 = vadd.f32 %v95, %v96
  %98 = vst [vmem:[%s3] sm:$0xff] %v97
  %v99 = vld [vmem:[%s4] sm:$0xff]
  %v100 = vadd.f32 %v85, %v86
  %v101 = vadd.f32 %v99, %v100
  %102 = vst [vmem:[%s4] sm:$0xff] %v101
  // Predicated region
  $region14: #{focal_tversky_loss.1} parent=0 // pred_check
    _
  $region15: #{focal_tversky_loss.1} parent=0 // pred_check_branch
    %104 = sbr.rel (0) target = $region17
  $region16: #{focal_tversky_loss.1} parent=0 // pred_region
    _
  $region17: #{focal_tversky_loss.1} parent=0 // pred_fallthru
    _
  // Predicated region
  $region18: #{focal_tversky_loss.1} parent=0 // pred_check
    _
  $region19: #{focal_tversky_loss.1} parent=0 // pred_check_branch
    %106 = sbr.rel (0) target = $region21
  $region20: #{focal_tversky_loss.1} parent=0 // pred_region
    _
  $region21: #{focal_tversky_loss.1} parent=0 // pred_fallthru
    _
  // Predicated region
  $region22: #{focal_tversky_loss.1} parent=0 // pred_check
    _
  $region23: #{focal_tversky_loss.1} parent=0 // pred_check_branch
    %108 = sbr.rel (0) target = $region25
  $region24: #{focal_tversky_loss.1} parent=0 // pred_region
    _
  $region25: #{focal_tversky_loss.1} parent=0 // pred_fallthru
    _
  // Predicated region
  $region26: #{focal_tversky_loss.1} parent=0 // pred_check
    _
  $region27: #{focal_tversky_loss.1} parent=0 // pred_check_branch
    %110 = sbr.rel (0) target = $region29
  $region28: #{focal_tversky_loss.1} parent=0 // pred_region
    _
  $region29: #{focal_tversky_loss.1} parent=0 // pred_fallthru
    _
  // Predicated region
  $region30: #{focal_tversky_loss.1} parent=0 // pred_check
    _
  $region31: #{focal_tversky_loss.1} parent=0 // pred_check_branch
    %112 = sbr.rel (0) target = $region33
  $region32: #{focal_tversky_loss.1} parent=0 // pred_region
    _
  $region33: #{focal_tversky_loss.1} parent=0 // pred_fallthru
    _
  // Predicated region
  $region34: #{focal_tversky_loss.1} parent=0 // pred_check
    _
  $region35: #{focal_tversky_loss.1} parent=0 // pred_check_branch
    %114 = sbr.rel (0) target = $region37
  $region36: #{focal_tversky_loss.1} parent=0 // pred_region
    _
  $region37: #{focal_tversky_loss.1} parent=0 // pred_fallthru
    _

</llo_original>
